<compile_context>
chip_gen: v7x
topology: tpu7x:2x2x1
jax: 0.10.0
libtpu: 0.0.40
codegen_flags: <defaults>
</compile_context>

<pallas_src>
import functools

import jax
import jax.numpy as jnp
import numpy as np
from jax.experimental import pallas as pl
from jax.experimental.pallas import tpu as pltpu

LANE = 128
_VMEM_LIMIT = 32 * 1024 * 1024   # fits the scoped-VMEM default on v6e/v7x, safe on v5e


def _round_up(x, m):
    return (x + m - 1) // m * m


# ----------------------------------------------------------------------------
# Conv kernel: one output image-row of Conv2d(3x3, stride 2, pad 1) + LeakyReLU.
# Inputs are the space-to-depth rows i and i+1; the 9 conv taps collapse into 4
# dense matmuls over the 4*Cin s2d channels (zero weights for the unused taps).
# ----------------------------------------------------------------------------
def _conv_row_kernel(xlo_ref, xhi_ref, w_ref, b_ref, o_ref, *, wo, neg_slope):
    xlo = xlo_ref[...]                     # [Wo+1, 4*Cin]  s2d row i   (taps dri=0)
    xhi = xhi_ref[...]                     # [Wo+1, 4*Cin]  s2d row i+1 (taps dri=1)
    acc = jnp.dot(xlo[:wo, :], w_ref[0], preferred_element_type=jnp.float32)
    acc += jnp.dot(xlo[1:wo + 1, :], w_ref[1], preferred_element_type=jnp.float32)
    acc += jnp.dot(xhi[:wo, :], w_ref[2], preferred_element_type=jnp.float32)
    acc += jnp.dot(xhi[1:wo + 1, :], w_ref[3], preferred_element_type=jnp.float32)
    y = acc + b_ref[...]                   # [Wo, NPAD] + [1, NPAD]
    y = jnp.where(y >= 0.0, y, neg_slope * y)          # LeakyReLU(0.2)
    o_ref[...] = y.astype(o_ref.dtype)


def conv3x3_s2_lrelu(x_nhwc, w_oihw, bias, *, neg_slope=0.2):
    """Conv2d(kernel=3x3, stride=2, padding=1, bias=True) + LeakyReLU(0.2).

    Returns ([B, Ho, Wo, NPAD] float32, Cout) with the channel axis zero-padded
    to a multiple of 128 (lane-dense stores); padded channels are exactly zero.
    """
    B, H, W, Cin = x_nhwc.shape
    Cout = w_oihw.shape[0]
    assert H % 2 == 0 and W % 2 == 0, "stride-2 conv expects even spatial dims"
    Ho, Wo = H // 2, W // 2
    C4 = 4 * Cin
    NPAD = _round_up(Cout, LANE)

    # --- glue: pad + space-to-depth (one cheap XLA pass; ~1x input bytes) -----
    xp = jnp.pad(x_nhwc, ((0, 0), (1, 1), (1, 1), (0, 0)))
    xs = xp.reshape(B, Ho + 1, 2, Wo + 1, 2, Cin)
    xs = jnp.transpose(xs, (0, 1, 3, 2, 4, 5)).reshape(B, Ho + 1, Wo + 1, C4)

    # --- fold 3x3 weights into 4 s2d taps (pure param prep, offline-able) -----
    # tap (dri, dci) uses s2d pixel (i+dri, j+dci); its (pr, pc, c) channel maps
    # to original tap (kh, kw) = (2*dri+pr, 2*dci+pc); kh==3 / kw==3 are zero.
    w_hwio = jnp.transpose(w_oihw, (2, 3, 1, 0))                   # [3,3,Cin,Cout]
    w4 = jnp.pad(w_hwio, ((0, 1), (0, 1), (0, 0), (0, 0)))         # [4,4,Cin,Cout]
    w_taps = w4.reshape(2, 2, 2, 2, Cin, Cout).transpose(0, 2, 1, 3, 4, 5)
    w2 = w_taps.reshape(4, C4, Cout)
    w2 = jnp.pad(w2, ((0, 0), (0, 0), (0, NPAD - Cout)))           # lane-pad N
    b2 = jnp.pad(bias.reshape(1, Cout), ((0, 0), (0, NPAD - Cout)))

    kernel = functools.partial(_conv_row_kernel, wo=Wo, neg_slope=neg_slope)
    flops = 2 * B * Ho * Wo * 4 * C4 * NPAD
    bytes_accessed = 4 * (2 * B * (Ho + 1) * (Wo + 1) * C4    # xs fetched twice
                          + 4 * C4 * NPAD + NPAD              # weights + bias
                          + B * Ho * Wo * NPAD)               # output

    y = pl.pallas_call(
        kernel,
        out_shape=jax.ShapeDtypeStruct((B, Ho, Wo, NPAD), jnp.float32),
        grid=(B, Ho),
        in_specs=[
            # s2d rows i and i+1: same array passed twice, squeezed row blocks
            # with index maps offset by one -> clean Blocked indexing, and the
            # per-row DMAs are double-buffered by the auto-pipeline.
            pl.BlockSpec((None, None, Wo + 1, C4), lambda b, i: (b, i, 0, 0)),
            pl.BlockSpec((None, None, Wo + 1, C4), lambda b, i: (b, i + 1, 0, 0)),
            # weights / bias: constant index maps -> fetched once, stay resident.
            pl.BlockSpec((4, C4, NPAD), lambda b, i: (0, 0, 0)),
            pl.BlockSpec((1, NPAD), lambda b, i: (0, 0)),
        ],
        out_specs=pl.BlockSpec((None, None, Wo, NPAD), lambda b, i: (b, i, 0, 0)),
        compiler_params=pltpu.CompilerParams(
            dimension_semantics=("parallel", "parallel"),
            vmem_limit_bytes=_VMEM_LIMIT),
        cost_estimate=pl.CostEstimate(flops=flops, transcendentals=0,
                                      bytes_accessed=bytes_accessed),
    )(xs, xs, w2, b2)
    return y, Cout


# ----------------------------------------------------------------------------
# Final Linear (out_features=1): VPU broadcast-multiply + cross-lane reduction
# (avoids a degenerate [B,F]x[F,1] MXU matmul and 1-lane masked stores).
# ----------------------------------------------------------------------------
def _linear_reduce_kernel(x_ref, w_ref, b_ref, o_ref):
    # x: [B, F], w: [1, F] (lane-dense), b: [1, 1] -> o: [B, 1]
    y = jnp.sum(x_ref[...] * w_ref[...], axis=-1, keepdims=True) + b_ref[...]
    o_ref[...] = y.astype(o_ref.dtype)


def linear_reduce(x, w_row, b):
    B, F = x.shape
    return pl.pallas_call(
        _linear_reduce_kernel,
        out_shape=jax.ShapeDtypeStruct((B, 1), jnp.float32),
        grid=(1,),
        in_specs=[pl.BlockSpec((B, F), lambda i: (0, 0)),
                  pl.BlockSpec((1, F), lambda i: (0, 0)),
                  pl.BlockSpec((1, 1), lambda i: (0, 0))],
        out_specs=pl.BlockSpec((B, 1), lambda i: (0, 0)),
        compiler_params=pltpu.CompilerParams(
            dimension_semantics=("arbitrary",),
            vmem_limit_bytes=_VMEM_LIMIT),
        cost_estimate=pl.CostEstimate(flops=2 * B * F, transcendentals=0,
                                      bytes_accessed=4 * (B * F + F + 1 + B)),
    )(x, w_row, b)


# ----------------------------------------------------------------------------
# Full discriminator forward (matches D.forward semantics)
# ----------------------------------------------------------------------------
def d_forward(x_nchw, params):
    x = jnp.transpose(x_nchw, (0, 2, 3, 1))            # NCHW -> NHWC, once
    n_layers = len(params["convs"])
    cout = x.shape[-1]
    for li, (w, b) in enumerate(params["convs"]):
        y_pad, cout = conv3x3_s2_lrelu(x, w, b)        # [B, Ho, Wo, NPAD]
        if li + 1 < n_layers:
            # Drop zero lane-padding before the next layer's s2d repack
            # (XLA fuses this slice into the following pad/reshape).
            x = y_pad[..., :cout]
        else:
            x = y_pad                                  # keep padded; weight matches below

    B, Hf, Wf, NP = x.shape
    xf = x.reshape(B, Hf * Wf * NP)                    # free row-major NHWC flatten

    # torch.flatten(start_dim=1) flattens NCHW as (C, H, W).  Instead of
    # transposing the activation at runtime, permute + lane-pad the Linear
    # weight once (zero-cost offline transform).
    wl, bl = params["linear"]                          # wl: [1, C*Hf*Wf], bl: [1]
    wl_r = wl.reshape(1, cout, Hf, Wf).transpose(0, 2, 3, 1)     # -> [1, Hf, Wf, C]
    wl_r = jnp.pad(wl_r, ((0, 0), (0, 0), (0, 0), (0, NP - cout)))
    wl_r = wl_r.reshape(1, Hf * Wf * NP)
    return linear_reduce(xf, wl_r, bl.reshape(1, 1))


# ----------------------------------------------------------------------------
# Pure-JAX reference (straightforward im2col math, independent of the s2d
# reformulation) for sanity checking.
# ----------------------------------------------------------------------------
def ref_forward(x_nchw, params):
    x = jnp.transpose(x_nchw, (0, 2, 3, 1))
    for (w, b) in params["convs"]:
        B, H, W, Cin = x.shape
        Ho, Wo = H // 2, W // 2
        xp = jnp.pad(x, ((0, 0), (1, 1), (1, 1), (0, 0)))
        cols = []
        for kh in range(3):
            for kw in range(3):
                cols.append(xp[:, kh:kh + 2 * Ho - 1:2, kw:kw + 2 * Wo - 1:2, :])
        patches = jnp.stack(cols, axis=3).reshape(B * Ho * Wo, -1)
        w2 = jnp.transpose(w, (2, 3, 1, 0)).reshape(9 * Cin, -1)
        y = patches @ w2 + b[None, :]
        y = jnp.where(y >= 0, y, 0.2 * y)
        x = y.reshape(B, Ho, Wo, -1)
    x = jnp.transpose(x, (0, 3, 1, 2)).reshape(x.shape[0], -1)
    wl, bl = params["linear"]
    return x @ wl.T + bl[None, :]


if __name__ == "__main__":
    # Model config (matching D.__init__ semantics at small size):
    #   num_channels=2, channel_list=[2, 8, 16], network_levels=2,
    #   kernel_size=(3, 3), scale_factor=2, lower_resolution=(4, 4)
    #   => input spatial 16x16, output_size = 4*4*16 = 256, Linear(256 -> 1)
    channel_list = [2, 8, 16]
    network_levels = 2
    lower_resolution = (4, 4)
    B, C, H, W = 2, channel_list[0], 16, 16

    key = jax.random.PRNGKey(0)
    keys = jax.random.split(key, 2 * network_levels + 3)

    convs = []
    for lvl in range(network_levels):
        cin, cout = channel_list[lvl], channel_list[lvl + 1]
        w = 0.1 * jax.random.normal(keys[2 * lvl], (cout, cin, 3, 3), jnp.float32)
        b = 0.1 * jax.random.normal(keys[2 * lvl + 1], (cout,), jnp.float32)
        convs.append((w, b))

    out_features = lower_resolution[0] * lower_resolution[1] * channel_list[-1]
    wl = 0.1 * jax.random.normal(keys[-3], (1, out_features), jnp.float32)
    bl = 0.1 * jax.random.normal(keys[-2], (1,), jnp.float32)
    params = {"convs": convs, "linear": (wl, bl)}

    x = jax.random.normal(keys[-1], (B, C, H, W), jnp.float32)

    out = jax.block_until_ready(d_forward(x, params))
    ref = jax.block_until_ready(ref_forward(x, params))

    assert out.shape == (B, 1), out.shape
    np.testing.assert_allclose(np.asarray(out), np.asarray(ref),
                               rtol=2e-2, atol=2e-2)
    print("KERNEL_OK")
</pallas_src>

<mosaic_0001>
module attributes {stable_mosaic.version = 11 : i64} {
  func.func @_conv_row_kernel(%arg0: i32, %arg1: i32, %arg2: memref<1x1x9x8xf32, #tpu.memory_space<vmem>>, %arg3: memref<1x1x9x8xf32, #tpu.memory_space<vmem>>, %arg4: memref<4x8x128xf32, #tpu.memory_space<vmem>>, %arg5: memref<1x128xf32, #tpu.memory_space<vmem>>, %arg6: memref<1x1x8x128xf32, #tpu.memory_space<vmem>>) attributes {dimension_semantics = [#tpu.dimension_semantics<parallel>, #tpu.dimension_semantics<parallel>], iteration_bounds = array<i64: 2, 8>, scalar_prefetch = 0 : i64, scratch_operands = 0 : i64, tpu.core_type = #tpu.core_type<tc>, window_params = [{transform_indices = @transform_0, window_bounds = array<i64: 1, 1, 9, 8>}, {transform_indices = @transform_1, window_bounds = array<i64: 1, 1, 9, 8>}, {pipeline_mode = #tpu.pipeline_mode<synchronous>, transform_indices = @transform_2, window_bounds = array<i64: 4, 8, 128>}, {pipeline_mode = #tpu.pipeline_mode<synchronous>, transform_indices = @transform_3, window_bounds = array<i64: 1, 128>}, {transform_indices = @transform_4, window_bounds = array<i64: 1, 1, 8, 128>}]} {
    %c0 = arith.constant 0 : index
    %c0_0 = arith.constant 0 : index
    %c0_1 = arith.constant 0 : index
    %c0_2 = arith.constant 0 : index
    %0 = vector.load %arg2[%c0, %c0_0, %c0_1, %c0_2] : memref<1x1x9x8xf32, #tpu.memory_space<vmem>>, vector<1x1x9x8xf32>
    %1 = vector.shape_cast %0 : vector<1x1x9x8xf32> to vector<9x8xf32>
    %c0_3 = arith.constant 0 : index
    %c0_4 = arith.constant 0 : index
    %c0_5 = arith.constant 0 : index
    %c0_6 = arith.constant 0 : index
    %2 = vector.load %arg3[%c0_3, %c0_4, %c0_5, %c0_6] : memref<1x1x9x8xf32, #tpu.memory_space<vmem>>, vector<1x1x9x8xf32>
    %3 = vector.shape_cast %2 : vector<1x1x9x8xf32> to vector<9x8xf32>
    %4 = vector.extract_strided_slice %1 {offsets = [0, 0], sizes = [8, 8], strides = [1, 1]} : vector<9x8xf32> to vector<8x8xf32>
    %c0_7 = arith.constant 0 : index
    %c0_8 = arith.constant 0 : index
    %c0_9 = arith.constant 0 : index
    %5 = vector.load %arg4[%c0_7, %c0_8, %c0_9] : memref<4x8x128xf32, #tpu.memory_space<vmem>>, vector<1x8x128xf32>
    %6 = vector.shape_cast %5 : vector<1x8x128xf32> to vector<8x128xf32>
    %cst = arith.constant dense<0.000000e+00> : vector<8x128xf32>
    %7 = tpu.matmul %4, %6, %cst {dimension_numbers = #tpu.dot_dimension_numbers<[1], [0], [0], [1], [0, 0, 1, 1], [], []>} : vector<8x8xf32>, vector<8x128xf32>, vector<8x128xf32> -> vector<8x128xf32>
    %8 = vector.extract_strided_slice %1 {offsets = [1, 0], sizes = [8, 8], strides = [1, 1]} : vector<9x8xf32> to vector<8x8xf32>
    %c1 = arith.constant 1 : index
    %c0_10 = arith.constant 0 : index
    %c0_11 = arith.constant 0 : index
    %9 = vector.load %arg4[%c1, %c0_10, %c0_11] : memref<4x8x128xf32, #tpu.memory_space<vmem>>, vector<1x8x128xf32>
    %10 = vector.shape_cast %9 : vector<1x8x128xf32> to vector<8x128xf32>
    %cst_12 = arith.constant dense<0.000000e+00> : vector<8x128xf32>
    %11 = tpu.matmul %8, %10, %cst_12 {dimension_numbers = #tpu.dot_dimension_numbers<[1], [0], [0], [1], [0, 0, 1, 1], [], []>} : vector<8x8xf32>, vector<8x128xf32>, vector<8x128xf32> -> vector<8x128xf32>
    %12 = arith.addf %7, %11 : vector<8x128xf32>
    %13 = vector.extract_strided_slice %3 {offsets = [0, 0], sizes = [8, 8], strides = [1, 1]} : vector<9x8xf32> to vector<8x8xf32>
    %c2 = arith.constant 2 : index
    %c0_13 = arith.constant 0 : index
    %c0_14 = arith.constant 0 : index
    %14 = vector.load %arg4[%c2, %c0_13, %c0_14] : memref<4x8x128xf32, #tpu.memory_space<vmem>>, vector<1x8x128xf32>
    %15 = vector.shape_cast %14 : vector<1x8x128xf32> to vector<8x128xf32>
    %cst_15 = arith.constant dense<0.000000e+00> : vector<8x128xf32>
    %16 = tpu.matmul %13, %15, %cst_15 {dimension_numbers = #tpu.dot_dimension_numbers<[1], [0], [0], [1], [0, 0, 1, 1], [], []>} : vector<8x8xf32>, vector<8x128xf32>, vector<8x128xf32> -> vector<8x128xf32>
    %17 = arith.addf %12, %16 : vector<8x128xf32>
    %18 = vector.extract_strided_slice %3 {offsets = [1, 0], sizes = [8, 8], strides = [1, 1]} : vector<9x8xf32> to vector<8x8xf32>
    %c3 = arith.constant 3 : index
    %c0_16 = arith.constant 0 : index
    %c0_17 = arith.constant 0 : index
    %19 = vector.load %arg4[%c3, %c0_16, %c0_17] : memref<4x8x128xf32, #tpu.memory_space<vmem>>, vector<1x8x128xf32>
    %20 = vector.shape_cast %19 : vector<1x8x128xf32> to vector<8x128xf32>
    %cst_18 = arith.constant dense<0.000000e+00> : vector<8x128xf32>
    %21 = tpu.matmul %18, %20, %cst_18 {dimension_numbers = #tpu.dot_dimension_numbers<[1], [0], [0], [1], [0, 0, 1, 1], [], []>} : vector<8x8xf32>, vector<8x128xf32>, vector<8x128xf32> -> vector<8x128xf32>
    %22 = arith.addf %17, %21 : vector<8x128xf32>
    %c0_19 = arith.constant 0 : index
    %c0_20 = arith.constant 0 : index
    %23 = vector.load %arg5[%c0_19, %c0_20] : memref<1x128xf32, #tpu.memory_space<vmem>>, vector<1x128xf32>
    %24 = vector.broadcast %23 : vector<1x128xf32> to vector<8x128xf32>
    %25 = arith.addf %22, %24 : vector<8x128xf32>
    %cst_21 = arith.constant 0.000000e+00 : f32
    %26 = vector.broadcast %cst_21 : f32 to vector<8x128xf32>
    %27 = arith.cmpf oge, %25, %26 : vector<8x128xf32>
    %cst_22 = arith.constant 2.000000e-01 : f32
    %28 = vector.broadcast %cst_22 : f32 to vector<8x128xf32>
    %29 = arith.mulf %28, %25 : vector<8x128xf32>
    %30 = arith.select %27, %25, %29 : vector<8x128xi1>, vector<8x128xf32>
    %c0_23 = arith.constant 0 : index
    %c0_24 = arith.constant 0 : index
    %c0_25 = arith.constant 0 : index
    %c0_26 = arith.constant 0 : index
    %31 = vector.load %arg6[%c0_23, %c0_24, %c0_25, %c0_26] : memref<1x1x8x128xf32, #tpu.memory_space<vmem>>, vector<1x1x8x128xf32>
    %32 = vector.shape_cast %31 : vector<1x1x8x128xf32> to vector<8x128xf32>
    %33 = vector.shape_cast %30 : vector<8x128xf32> to vector<1x1x8x128xf32>
    tpu.vector_store %arg6[%c0_23, %c0_24, %c0_25, %c0_26], %33 {strides = array<i32>} : memref<1x1x8x128xf32, #tpu.memory_space<vmem>>, vector<1x1x8x128xf32>,
    return
  }
  func.func @transform_0(%arg0: i32, %arg1: i32) -> (i32, i32, i32, i32) {
    %c0_i32 = arith.constant 0 : i32
    %c0_i32_0 = arith.constant 0 : i32
    %c0_i32_1 = arith.constant 0 : i32
    return %arg0, %arg1, %c0_i32, %c0_i32_0 : i32, i32, i32, i32
  }
  func.func @transform_1(%arg0: i32, %arg1: i32) -> (i32, i32, i32, i32) {
    %c1_i32 = arith.constant 1 : i32
    %0 = arith.addi %arg1, %c1_i32 : i32
    %c0_i32 = arith.constant 0 : i32
    %c0_i32_0 = arith.constant 0 : i32
    %c0_i32_1 = arith.constant 0 : i32
    return %arg0, %0, %c0_i32, %c0_i32_0 : i32, i32, i32, i32
  }
  func.func @transform_2(%arg0: i32, %arg1: i32) -> (i32, i32, i32) {
    %c0_i32 = arith.constant 0 : i32
    %c0_i32_0 = arith.constant 0 : i32
    %c0_i32_1 = arith.constant 0 : i32
    %c0_i32_2 = arith.constant 0 : i32
    return %c0_i32, %c0_i32_0, %c0_i32_1 : i32, i32, i32
  }
  func.func @transform_3(%arg0: i32, %arg1: i32) -> (i32, i32) {
    %c0_i32 = arith.constant 0 : i32
    %c0_i32_0 = arith.constant 0 : i32
    %c0_i32_1 = arith.constant 0 : i32
    return %c0_i32, %c0_i32_0 : i32, i32
  }
  func.func @transform_4(%arg0: i32, %arg1: i32) -> (i32, i32, i32, i32) {
    %c0_i32 = arith.constant 0 : i32
    %c0_i32_0 = arith.constant 0 : i32
    %c0_i32_1 = arith.constant 0 : i32
    return %arg0, %arg1, %c0_i32, %c0_i32_0 : i32, i32, i32, i32
  }
}

</mosaic_0001>

<llo_original>
// kernel: tpu_custom_call.1
$region0: #{tpu_custom_call.1}
  #allocation0 [shape = 'u32[]', space=smem, size = 0x4, offset = 0x4, fixed_abs, tag = 'smem constant byte address 0x4 - core index']
  #allocation1 [shape = 'u32[144,128]{1,0:T(1,128)}', space=vmem, size = 0x12000, scoped, tag = 'internal scratch']
  %s0 = inlined_call_operand.vmem [shape: f32[2,9,9,8], index: 0, kind: input, shape index: {}]
  %s1 = inlined_call_operand.vmem [shape: f32[2,9,9,8], index: 1, kind: input, shape index: {}]
  %s2 = inlined_call_operand.vmem [shape: f32[4,8,128], index: 2, kind: input, shape index: {}]
  %s3 = inlined_call_operand.vmem [shape: f32[1,128], index: 3, kind: input, shape index: {}]
  %s4 = inlined_call_operand.hbm [shape: f32[2,8,8,128], index: 4, kind: output, shape index: {}]
  %s5 = sld [smem:[#allocation0]]
  $region49: #{tpu_custom_call.1} parent=0
    _
  %s7 = ssub.s32 1, %s5
  %s8 = scalar_select 0, %s7, %s5
  $region1: #{tpu_custom_call.1} parent=0
    #allocation2 [shape = 'u8[8192]{0}', space=vmem, size = 0x2000, scoped, tag = 'output window, operand 0']
    #allocation3 [shape = 's32[2]{0}', space=sflag, size = 0x8, scoped, tag = 'scoped memory for tpu_custom_call.1']
    %9 = vsyncpa [#allocation3], 0
    %s10 = scalar_lea.sflag [#allocation3], 1
    %11 = vsyncpa %s10, 0
    loop: start=0, step=1, limit=18
    $region2: #{tpu_custom_call.1} parent=1 // loop_pre_header
      _
    $region3: #{tpu_custom_call.1} parent=1 // loop_header
      %s13 = sphi 0, %s17
      %p14 = scmp.ge.s32.totalorder %s13, 18
      %s20 = sphi 0, %s32
      %s21 = sphi 0, %s28
      %s22 = sphi 0, %s20
      %s23 = sphi 0, %s21
      %s24 = sphi 0, %s22
      %s25 = sphi 0, %s23
      %s37 = sphi 0, %s39
      %s40 = sphi 0, %s37
      %s41 = sphi 0, %s40
      %s57 = sphi 0, %s41
      %s67 = sphi 0, %s69
      %s70 = sphi 0, %s67
      %s71 = sphi 0, %s70
      %s87 = sphi 0, %s71
      %s91 = sphi 0, %s91
      %s93 = sphi 0, %s91
      %s94 = sphi 0, %s93
      %s108 = sphi 0, %s94
      %s112 = sphi 0, %s112
      %s114 = sphi 0, %s112
      %s115 = sphi 0, %s114
      %s129 = sphi 0, %s115
      %s137 = sphi 0, %s139
      %s140 = sphi 0, %s137
      %s141 = sphi 0, %s140
      %s157 = sphi 0, %s141
    $region4: #{tpu_custom_call.1} parent=1 // loop_header_branch
      %16 = sbr.rel (%p14) target = $region8
    $region5: #{tpu_custom_call.1} parent=1 // loop_body
      %s18 = ssub.s32 %s13, 1
      %s19 = ssub.s32 %s13, 2
      %s26 = sadd.s32 1, %s21
      %p27 = scmp.ge.s32.totalorder %s26, 8
      %s28 = scalar_select %p27, 0, %s26
      %s29 = sadd.s32 1, %s20
      %s30 = scalar_select %p27, %s29, %s20
      %p31 = scmp.ge.s32.totalorder %s30, 2
      %s32 = scalar_select %p31, 0, %s30
      %s33 = ssub.s32 %s20, %s32
      %s34 = ssub.s32 %s21, %s28
      %s35 = sor.u32 %s33, %s34
      %p36 = scmp.eq.s32.totalorder %s35, 0
      %s38 = sadd.s32 %s37, 1
      %s39 = scalar_select %p36, %s37, %s38
      %p42 = pneg %p36
      %p43 = scmp.eq.s32.totalorder %s13, 15
      %p44 = por %p42, %p43
      %p45 = scmp.ne.s32.totalorder %s37, %s40
      %p46 = scmp.eq.s32.totalorder %s13, 0
      %p47 = por %p45, %p46
      %p48 = scmp.ne.s32.totalorder %s37, %s40
      %p49 = scmp.eq.s32.totalorder %s18, 15
      %p50 = por %p48, %p49
      %p51 = scmp.ne.s32.totalorder %s40, %s41
      %p52 = scmp.eq.s32.totalorder %s18, 0
      %p53 = por %p51, %p52
      %p54 = scmp.ne.s32.totalorder %s40, %s41
      %p55 = scmp.eq.s32.totalorder %s19, 15
      %p56 = por %p54, %p55
      %p58 = scmp.ne.s32.totalorder %s41, %s57
      %p59 = scmp.eq.s32.totalorder %s19, 0
      %p60 = por %p58, %p59
      %s61 = sadd.s32 %s21, 1
      %s62 = sadd.s32 %s28, 1
      %s63 = ssub.s32 %s20, %s32
      %s64 = ssub.s32 %s61, %s62
      %s65 = sor.u32 %s63, %s64
      %p66 = scmp.eq.s32.totalorder %s65, 0
      %s68 = sadd.s32 %s67, 1
      %s69 = scalar_select %p66, %s67, %s68
      %p72 = pneg %p66
      %p73 = scmp.eq.s32.totalorder %s13, 15
      %p74 = por %p72, %p73
      %p75 = scmp.ne.s32.totalorder %s67, %s70
      %p76 = scmp.eq.s32.totalorder %s13, 0
      %p77 = por %p75, %p76
      %p78 = scmp.ne.s32.totalorder %s67, %s70
      %p79 = scmp.eq.s32.totalorder %s18, 15
      %p80 = por %p78, %p79
      %p81 = scmp.ne.s32.totalorder %s70, %s71
      %p82 = scmp.eq.s32.totalorder %s18, 0
      %p83 = por %p81, %p82
      %p84 = scmp.ne.s32.totalorder %s70, %s71
      %p85 = scmp.eq.s32.totalorder %s19, 15
      %p86 = por %p84, %p85
      %p88 = scmp.ne.s32.totalorder %s71, %s87
      %p89 = scmp.eq.s32.totalorder %s19, 0
      %p90 = por %p88, %p89
      %s92 = sadd.s32 %s91, 1
      %p95 = scmp.eq.s32.totalorder %s13, 15
      %p96 = scmp.ne.s32.totalorder %s91, %s93
      %p97 = scmp.eq.s32.totalorder %s13, 0
      %p98 = por %p96, %p97
      %p99 = scmp.ne.s32.totalorder %s91, %s93
      %p100 = scmp.eq.s32.totalorder %s18, 15
      %p101 = por %p99, %p100
      %p102 = scmp.ne.s32.totalorder %s93, %s94
      %p103 = scmp.eq.s32.totalorder %s18, 0
      %p104 = por %p102, %p103
      %p105 = scmp.ne.s32.totalorder %s93, %s94
      %p106 = scmp.eq.s32.totalorder %s19, 15
      %p107 = por %p105, %p106
      %p109 = scmp.ne.s32.totalorder %s94, %s108
      %p110 = scmp.eq.s32.totalorder %s19, 0
      %p111 = por %p109, %p110
      %s113 = sadd.s32 %s112, 1
      %p116 = scmp.eq.s32.totalorder %s13, 15
      %p117 = scmp.ne.s32.totalorder %s112, %s114
      %p118 = scmp.eq.s32.totalorder %s13, 0
      %p119 = por %p117, %p118
      %p120 = scmp.ne.s32.totalorder %s112, %s114
      %p121 = scmp.eq.s32.totalorder %s18, 15
      %p122 = por %p120, %p121
      %p123 = scmp.ne.s32.totalorder %s114, %s115
      %p124 = scmp.eq.s32.totalorder %s18, 0
      %p125 = por %p123, %p124
      %p126 = scmp.ne.s32.totalorder %s114, %s115
      %p127 = scmp.eq.s32.totalorder %s19, 15
      %p128 = por %p126, %p127
      %p130 = scmp.ne.s32.totalorder %s115, %s129
      %p131 = scmp.eq.s32.totalorder %s19, 0
      %p132 = por %p130, %p131
      %s133 = ssub.s32 %s20, %s32
      %s134 = ssub.s32 %s21, %s28
      %s135 = sor.u32 %s133, %s134
      %p136 = scmp.eq.s32.totalorder %s135, 0
      %s138 = sadd.s32 %s137, 1
      %s139 = scalar_select %p136, %s137, %s138
      %p142 = pneg %p136
      %p143 = scmp.eq.s32.totalorder %s13, 15
      %p144 = por %p142, %p143
      %p145 = scmp.ne.s32.totalorder %s137, %s140
      %p146 = scmp.eq.s32.totalorder %s13, 0
      %p147 = por %p145, %p146
      %p148 = scmp.ne.s32.totalorder %s137, %s140
      %p149 = scmp.eq.s32.totalorder %s18, 15
      %p150 = por %p148, %p149
      %p151 = scmp.ne.s32.totalorder %s140, %s141
      %p152 = scmp.eq.s32.totalorder %s18, 0
      %p153 = por %p151, %p152
      %p154 = scmp.ne.s32.totalorder %s140, %s141
      %p155 = scmp.eq.s32.totalorder %s19, 15
      %p156 = por %p154, %p155
      %p158 = scmp.ne.s32.totalorder %s141, %s157
      %p159 = scmp.eq.s32.totalorder %s19, 0
      %p160 = por %p158, %p159
      %p161 = scmp.le.s32.totalorder 1, %s13
      %p162 = scmp.lt.s32.totalorder %s13, 17
      %p163 = pnand %p161, %p162
      %p164 = pneg %p163
      // Predicated region
      $region9: #{tpu_custom_call.1} parent=5 // pred_check
        _
      $region10: #{tpu_custom_call.1} parent=5 // pred_check_branch
        %166 = sbr.rel (%p163) target = $region12
      $region11: #{tpu_custom_call.1} parent=5 // pred_region
        %s167 = ssub.s32 %s13, 1
        // Predicated region
        $region13: #{tpu_custom_call.1} parent=11 // pred_check
          %p168 = pneg %p104
        $region14: #{tpu_custom_call.1} parent=11 // pred_check_branch
          %170 = sbr.rel (%p168) target = $region16
        $region15: #{tpu_custom_call.1} parent=11 // pred_region
          _
        $region16: #{tpu_custom_call.1} parent=11 // pred_fallthru
          _
        // Predicated region
        $region17: #{tpu_custom_call.1} parent=11 // pred_check
          %p171 = pneg %p125
        $region18: #{tpu_custom_call.1} parent=11 // pred_check_branch
          %173 = sbr.rel (%p171) target = $region20
        $region19: #{tpu_custom_call.1} parent=11 // pred_region
          _
        $region20: #{tpu_custom_call.1} parent=11 // pred_fallthru
          _
      $region12: #{tpu_custom_call.1} parent=5 // pred_fallthru
        _
      %p174 = scmp.lt.s32.totalorder %s13, 16
      // Predicated region
      $region21: #{tpu_custom_call.1} parent=5 // pred_check
        %p175 = pneg %p174
      $region22: #{tpu_custom_call.1} parent=5 // pred_check_branch
        %177 = sbr.rel (%p175) target = $region24
      $region23: #{tpu_custom_call.1} parent=5 // pred_region
        // Predicated region
        $region25: #{tpu_custom_call.1} parent=23 // pred_check
          %p178 = pneg %p47
        $region26: #{tpu_custom_call.1} parent=23 // pred_check_branch
          %180 = sbr.rel (%p178) target = $region28
        $region27: #{tpu_custom_call.1} parent=23 // pred_region
          %p181 = scmp.lt.s32.totalorder %s20, 1
          %s182 = scalar_select %p181, %s20, 1
          %p183 = scmp.lt.s32.totalorder %s21, 8
          %s184 = scalar_select %p183, %s21, 8
          %s185 = smul.addr %s184, 2
          %s186 = smul.addr %s182, 18
          %s187 = sadd.s32 %s185, %s186
          %s188 = smul.addr %s187, 8
          %s189 = scalar_lea.vmem %s0, %s188
        $region28: #{tpu_custom_call.1} parent=23 // pred_fallthru
          _
        // Predicated region
        $region29: #{tpu_custom_call.1} parent=23 // pred_check
          %p190 = pneg %p77
        $region30: #{tpu_custom_call.1} parent=23 // pred_check_branch
          %192 = sbr.rel (%p190) target = $region32
        $region31: #{tpu_custom_call.1} parent=23 // pred_region
          %s193 = sadd.s32 %s21, 1
          %p194 = scmp.lt.s32.totalorder %s20, 1
          %s195 = scalar_select %p194, %s20, 1
          %p196 = scmp.lt.s32.totalorder %s193, 8
          %s197 = scalar_select %p196, %s193, 8
          %s198 = smul.addr %s197, 2
          %s199 = smul.addr %s195, 18
          %s200 = sadd.s32 %s198, %s199
          %s201 = smul.addr %s200, 8
          %s202 = scalar_lea.vmem %s1, %s201
          %s203 = sadd.s32 %s21, 1
        $region32: #{tpu_custom_call.1} parent=23 // pred_fallthru
          _
      $region24: #{tpu_custom_call.1} parent=5 // pred_fallthru
        _
      %p204 = scmp.le.s32.totalorder 1, %s13
      %p205 = scmp.lt.s32.totalorder %s13, 17
      %p206 = pnand %p204, %p205
      %p207 = pneg %p206
      // Predicated region
      $region33: #{tpu_custom_call.1} parent=5 // pred_check
        _
      $region34: #{tpu_custom_call.1} parent=5 // pred_check_branch
        %209 = sbr.rel (%p206) target = $region36
      $region35: #{tpu_custom_call.1} parent=5 // pred_region
        %s210 = ssub.s32 %s13, 1
        %p211 = scmp.lt.s32.totalorder %s22, 1
        %s212 = scalar_select %p211, %s22, 1
        %p213 = scmp.lt.s32.totalorder %s23, 8
        %s214 = scalar_select %p213, %s23, 8
        %s215 = smul.addr %s214, 2
        %s216 = smul.addr %s212, 18
        %s217 = sadd.s32 %s215, %s216
        %s218 = smul.addr %s217, 8
        %s219 = scalar_lea.vmem %s0, %s218
        %p220 = pneg %p53
        %p221 = pneg %p50
        %s222 = sadd.s32 %s23, 1
        %p223 = scmp.lt.s32.totalorder %s22, 1
        %s224 = scalar_select %p223, %s22, 1
        %p225 = scmp.lt.s32.totalorder %s222, 8
        %s226 = scalar_select %p225, %s222, 8
        %s227 = smul.addr %s226, 2
        %s228 = smul.addr %s224, 18
        %s229 = sadd.s32 %s227, %s228
        %s230 = smul.addr %s229, 8
        %s231 = scalar_lea.vmem %s1, %s230
        %p232 = pneg %p83
        %p233 = pneg %p80
        %p234 = pneg %p104
        %p235 = pneg %p101
        %p236 = pneg %p125
        %p237 = pneg %p122
        %p238 = pneg %p153
        %p239 = pneg %p150
        %s240 = sand.u32 %s140, 1
        %s241 = scalar_lea.sflag [#allocation3], %s240
        %s242 = sand.u32 %s140, 1
        %s243 = smul.addr %s242, 8
        %s244 = scalar_lea.vmem [#allocation2], %s243
        %p245 = scmp.lt.s32.totalorder %s22, 1
        %s246 = scalar_select %p245, %s22, 1
        %p247 = scmp.lt.s32.totalorder %s23, 8
        %s248 = scalar_select %p247, %s23, 8
        %s249 = smul.addr %s248, 2
        %s250 = smul.addr %s246, 18
        %s251 = sadd.s32 %s249, %s250
        %s252 = smul.addr %s251, 8
        %s253 = scalar_lea.vmem %s0, %s252
        %s254 = sadd.s32 %s23, 1
        %p255 = scmp.lt.s32.totalorder %s22, 1
        %s256 = scalar_select %p255, %s22, 1
        %p257 = scmp.lt.s32.totalorder %s254, 8
        %s258 = scalar_select %p257, %s254, 8
        %s259 = smul.addr %s258, 2
        %s260 = smul.addr %s256, 18
        %s261 = sadd.s32 %s259, %s260
        %s262 = smul.addr %s261, 8
        %s263 = scalar_lea.vmem %s1, %s262
        %s264 = sadd.s32 %s23, 1
        %v265 = vld [vmem:[%s253] sm:$0xff]
        %v266 = vld [vmem:[%s253 + $0x8] sm:$0x1]
        %v267 = vld [vmem:[%s263] sm:$0xff]
        %v268 = vld [vmem:[%s263 + $0x8] sm:$0x1]
        %v269 = vld [vmem:[%s2] sm:$0xff]
        %s270 = scalar_lea.vmem %s2, 8
        %v271 = vld [vmem:[%s270] sm:$0xff]
        %vm274 = vcmask 1046528
        %v275 = vrot.slane %v265, 1
        %v276 = vrot.slane %v266, 1
        %v277 = vsel %vm274, %v275, %v276
        %vm278 = vcmask 64512
        %v279 = vsel %vm278, %v277, 0
        %281 = vmatprep.subr.mxu0 0.0
        %282 = vmatpush1.msra.mxu0 %v271
        %283 = vmatprep.subr.mxu0 0.0
        %284 = vmatpush1.msra.mxu0 0.0
        %285 = vmatprep.subr.mxu0 0.0
        %286 = vmatpush1.msra.mxu0 0.0
        %287 = vmatprep.subr.mxu0 0.0
        %288 = vmatpush1.msra.mxu0 0.0
        %289 = vmatprep.subr.mxu0 0.0
        %290 = vmatpush1.msra.mxu0 0.0
        %291 = vmatprep.subr.mxu0 0.0
        %292 = vmatpush1.msra.mxu0 0.0
        %293 = vmatprep.subr.mxu0 0.0
        %294 = vmatpush1.msra.mxu0 0.0
        %295 = vmatprep.subr.mxu0 0.0
        %296 = vmatpush1.msra.mxu0 0.0
        %297 = vmatprep.subr.mxu0 0.0
        %298 = vmatpush1.msra.mxu0 0.0
        %299 = vmatprep.subr.mxu0 0.0
        %300 = vmatpush1.msra.mxu0 0.0
        %301 = vmatprep.subr.mxu0 0.0
        %302 = vmatpush1.msra.mxu0 0.0
        %303 = vmatprep.subr.mxu0 0.0
        %304 = vmatpush1.msra.mxu0 0.0
        %305 = vmatprep.subr.mxu0 0.0
        %306 = vmatpush1.msra.mxu0 0.0
        %307 = vmatprep.subr.mxu0 0.0
        %308 = vmatpush1.msra.mxu0 0.0
        %309 = vmatprep.subr.mxu0 0.0
        %310 = vmatpush1.msra.mxu0 0.0
        %311 = vmatprep.subr.mxu0 0.0
        %312 = vmatpush1.msra.mxu0 0.0
        %313 = vmatprep.subr.mxu0 0.0
        %314 = vmatpush1.msra.mxu0 0.0
        %315 = vmatprep.subr.mxu0 0.0
        %316 = vmatpush1.msra.mxu0 0.0
        %317 = vmatprep.subr.mxu0 0.0
        %318 = vmatpush1.msra.mxu0 0.0
        %319 = vmatprep.subr.mxu0 0.0
        %320 = vmatpush1.msra.mxu0 0.0
        %321 = vmatprep.subr.mxu0 0.0
        %322 = vmatpush1.msra.mxu0 0.0
        %323 = vmatprep.subr.mxu0 0.0
        %324 = vmatpush1.msra.mxu0 0.0
        %325 = vmatprep.subr.mxu0 0.0
        %326 = vmatpush1.msra.mxu0 0.0
        %327 = vmatprep.subr.mxu0 0.0
        %328 = vmatpush1.msra.mxu0 0.0
        %329 = vmatprep.subr.mxu0 0.0
        %330 = vmatpush1.msra.mxu0 0.0
        %331 = vmatprep.subr.mxu0 0.0
        %332 = vmatpush1.msra.mxu0 0.0
        %333 = vmatprep.subr.mxu0 0.0
        %334 = vmatpush1.msra.mxu0 0.0
        %335 = vmatprep.subr.mxu0 0.0
        %336 = vmatpush1.msra.mxu0 0.0
        %337 = vmatprep.subr.mxu0 0.0
        %338 = vmatpush1.msra.mxu0 0.0
        %339 = vmatprep.subr.mxu0 0.0
        %340 = vmatpush1.msra.mxu0 0.0
        %341 = vmatprep.subr.mxu0 0.0
        %342 = vmatpush1.msra.mxu0 0.0
        %343 = vmatprep.subr.mxu0 0.0
        %344 = vmatpush1.msra.mxu0 0.0
        %345 = vmatprep.mubr.f32.mxu0 0.0
        %346 = vmatmul.mubr.f32.gmra.mrb[0].mxu0 %v279
        %v347 = vpop.f32.mrb[0].mxu0
        %v348 = vadd.f32 0.0, %v347
        %v349 = vpop.f32.mrb[0].mxu0
        %350 = vdwg.mxu0
        %v351 = vsel %vm278, %v265, 0
        %353 = vmatprep.subr.mxu0 0.0
        %354 = vmatpush1.msra.mxu0 %v269
        %355 = vmatprep.subr.mxu0 0.0
        %356 = vmatpush1.msra.mxu0 0.0
        %357 = vmatprep.subr.mxu0 0.0
        %358 = vmatpush1.msra.mxu0 0.0
        %359 = vmatprep.subr.mxu0 0.0
        %360 = vmatpush1.msra.mxu0 0.0
        %361 = vmatprep.subr.mxu0 0.0
        %362 = vmatpush1.msra.mxu0 0.0
        %363 = vmatprep.subr.mxu0 0.0
        %364 = vmatpush1.msra.mxu0 0.0
        %365 = vmatprep.subr.mxu0 0.0
        %366 = vmatpush1.msra.mxu0 0.0
        %367 = vmatprep.subr.mxu0 0.0
        %368 = vmatpush1.msra.mxu0 0.0
        %369 = vmatprep.subr.mxu0 0.0
        %370 = vmatpush1.msra.mxu0 0.0
        %371 = vmatprep.subr.mxu0 0.0
        %372 = vmatpush1.msra.mxu0 0.0
        %373 = vmatprep.subr.mxu0 0.0
        %374 = vmatpush1.msra.mxu0 0.0
        %375 = vmatprep.subr.mxu0 0.0
        %376 = vmatpush1.msra.mxu0 0.0
        %377 = vmatprep.subr.mxu0 0.0
        %378 = vmatpush1.msra.mxu0 0.0
        %379 = vmatprep.subr.mxu0 0.0
        %380 = vmatpush1.msra.mxu0 0.0
        %381 = vmatprep.subr.mxu0 0.0
        %382 = vmatpush1.msra.mxu0 0.0
        %383 = vmatprep.subr.mxu0 0.0
        %384 = vmatpush1.msra.mxu0 0.0
        %385 = vmatprep.subr.mxu0 0.0
        %386 = vmatpush1.msra.mxu0 0.0
        %387 = vmatprep.subr.mxu0 0.0
        %388 = vmatpush1.msra.mxu0 0.0
        %389 = vmatprep.subr.mxu0 0.0
        %390 = vmatpush1.msra.mxu0 0.0
        %391 = vmatprep.subr.mxu0 0.0
        %392 = vmatpush1.msra.mxu0 0.0
        %393 = vmatprep.subr.mxu0 0.0
        %394 = vmatpush1.msra.mxu0 0.0
        %395 = vmatprep.subr.mxu0 0.0
        %396 = vmatpush1.msra.mxu0 0.0
        %397 = vmatprep.subr.mxu0 0.0
        %398 = vmatpush1.msra.mxu0 0.0
        %399 = vmatprep.subr.mxu0 0.0
        %400 = vmatpush1.msra.mxu0 0.0
        %401 = vmatprep.subr.mxu0 0.0
        %402 = vmatpush1.msra.mxu0 0.0
        %403 = vmatprep.subr.mxu0 0.0
        %404 = vmatpush1.msra.mxu0 0.0
        %405 = vmatprep.subr.mxu0 0.0
        %406 = vmatpush1.msra.mxu0 0.0
        %407 = vmatprep.subr.mxu0 0.0
        %408 = vmatpush1.msra.mxu0 0.0
        %409 = vmatprep.subr.mxu0 0.0
        %410 = vmatpush1.msra.mxu0 0.0
        %411 = vmatprep.subr.mxu0 0.0
        %412 = vmatpush1.msra.mxu0 0.0
        %413 = vmatprep.subr.mxu0 0.0
        %414 = vmatpush1.msra.mxu0 0.0
        %415 = vmatprep.subr.mxu0 0.0
        %416 = vmatpush1.msra.mxu0 0.0
        %417 = vmatprep.mubr.f32.mxu0 0.0
        %418 = vmatmul.mubr.f32.gmra.mrb[0].mxu0 %v351
        %v419 = vpop.f32.mrb[0].mxu0
        %v420 = vadd.f32 %v348, %v419
        %v421 = vpop.f32.mrb[0].mxu0
        %422 = vdwg.mxu0
        %s423 = scalar_lea.vmem %s2, 16
        %v424 = vld [vmem:[%s423] sm:$0xff]
        %v426 = vsel %vm278, %v267, 0
        %428 = vmatprep.subr.mxu0 0.0
        %429 = vmatpush1.msra.mxu0 %v424
        %430 = vmatprep.subr.mxu0 0.0
        %431 = vmatpush1.msra.mxu0 0.0
        %432 = vmatprep.subr.mxu0 0.0
        %433 = vmatpush1.msra.mxu0 0.0
        %434 = vmatprep.subr.mxu0 0.0
        %435 = vmatpush1.msra.mxu0 0.0
        %436 = vmatprep.subr.mxu0 0.0
        %437 = vmatpush1.msra.mxu0 0.0
        %438 = vmatprep.subr.mxu0 0.0
        %439 = vmatpush1.msra.mxu0 0.0
        %440 = vmatprep.subr.mxu0 0.0
        %441 = vmatpush1.msra.mxu0 0.0
        %442 = vmatprep.subr.mxu0 0.0
        %443 = vmatpush1.msra.mxu0 0.0
        %444 = vmatprep.subr.mxu0 0.0
        %445 = vmatpush1.msra.mxu0 0.0
        %446 = vmatprep.subr.mxu0 0.0
        %447 = vmatpush1.msra.mxu0 0.0
        %448 = vmatprep.subr.mxu0 0.0
        %449 = vmatpush1.msra.mxu0 0.0
        %450 = vmatprep.subr.mxu0 0.0
        %451 = vmatpush1.msra.mxu0 0.0
        %452 = vmatprep.subr.mxu0 0.0
        %453 = vmatpush1.msra.mxu0 0.0
        %454 = vmatprep.subr.mxu0 0.0
        %455 = vmatpush1.msra.mxu0 0.0
        %456 = vmatprep.subr.mxu0 0.0
        %457 = vmatpush1.msra.mxu0 0.0
        %458 = vmatprep.subr.mxu0 0.0
        %459 = vmatpush1.msra.mxu0 0.0
        %460 = vmatprep.subr.mxu0 0.0
        %461 = vmatpush1.msra.mxu0 0.0
        %462 = vmatprep.subr.mxu0 0.0
        %463 = vmatpush1.msra.mxu0 0.0
        %464 = vmatprep.subr.mxu0 0.0
        %465 = vmatpush1.msra.mxu0 0.0
        %466 = vmatprep.subr.mxu0 0.0
        %467 = vmatpush1.msra.mxu0 0.0
        %468 = vmatprep.subr.mxu0 0.0
        %469 = vmatpush1.msra.mxu0 0.0
        %470 = vmatprep.subr.mxu0 0.0
        %471 = vmatpush1.msra.mxu0 0.0
        %472 = vmatprep.subr.mxu0 0.0
        %473 = vmatpush1.msra.mxu0 0.0
        %474 = vmatprep.subr.mxu0 0.0
        %475 = vmatpush1.msra.mxu0 0.0
        %476 = vmatprep.subr.mxu0 0.0
        %477 = vmatpush1.msra.mxu0 0.0
        %478 = vmatprep.subr.mxu0 0.0
        %479 = vmatpush1.msra.mxu0 0.0
        %480 = vmatprep.subr.mxu0 0.0
        %481 = vmatpush1.msra.mxu0 0.0
        %482 = vmatprep.subr.mxu0 0.0
        %483 = vmatpush1.msra.mxu0 0.0
        %484 = vmatprep.subr.mxu0 0.0
        %485 = vmatpush1.msra.mxu0 0.0
        %486 = vmatprep.subr.mxu0 0.0
        %487 = vmatpush1.msra.mxu0 0.0
        %488 = vmatprep.subr.mxu0 0.0
        %489 = vmatpush1.msra.mxu0 0.0
        %490 = vmatprep.subr.mxu0 0.0
        %491 = vmatpush1.msra.mxu0 0.0
        %492 = vmatprep.mubr.f32.mxu0 0.0
        %493 = vmatmul.mubr.f32.gmra.mrb[0].mxu0 %v426
        %v494 = vpop.f32.mrb[0].mxu0
        %v495 = vadd.f32 0.0, %v494
        %v496 = vpop.f32.mrb[0].mxu0
        %497 = vdwg.mxu0
        %v498 = vadd.f32 %v420, %v495
        %s499 = scalar_lea.vmem %s2, 24
        %v500 = vld [vmem:[%s499] sm:$0xff]
        %v502 = vrot.slane %v267, 1
        %v503 = vrot.slane %v268, 1
        %v504 = vsel %vm274, %v502, %v503
        %v505 = vsel %vm278, %v504, 0
        %507 = vmatprep.subr.mxu0 0.0
        %508 = vmatpush1.msra.mxu0 %v500
        %509 = vmatprep.subr.mxu0 0.0
        %510 = vmatpush1.msra.mxu0 0.0
        %511 = vmatprep.subr.mxu0 0.0
        %512 = vmatpush1.msra.mxu0 0.0
        %513 = vmatprep.subr.mxu0 0.0
        %514 = vmatpush1.msra.mxu0 0.0
        %515 = vmatprep.subr.mxu0 0.0
        %516 = vmatpush1.msra.mxu0 0.0
        %517 = vmatprep.subr.mxu0 0.0
        %518 = vmatpush1.msra.mxu0 0.0
        %519 = vmatprep.subr.mxu0 0.0
        %520 = vmatpush1.msra.mxu0 0.0
        %521 = vmatprep.subr.mxu0 0.0
        %522 = vmatpush1.msra.mxu0 0.0
        %523 = vmatprep.subr.mxu0 0.0
        %524 = vmatpush1.msra.mxu0 0.0
        %525 = vmatprep.subr.mxu0 0.0
        %526 = vmatpush1.msra.mxu0 0.0
        %527 = vmatprep.subr.mxu0 0.0
        %528 = vmatpush1.msra.mxu0 0.0
        %529 = vmatprep.subr.mxu0 0.0
        %530 = vmatpush1.msra.mxu0 0.0
        %531 = vmatprep.subr.mxu0 0.0
        %532 = vmatpush1.msra.mxu0 0.0
        %533 = vmatprep.subr.mxu0 0.0
        %534 = vmatpush1.msra.mxu0 0.0
        %535 = vmatprep.subr.mxu0 0.0
        %536 = vmatpush1.msra.mxu0 0.0
        %537 = vmatprep.subr.mxu0 0.0
        %538 = vmatpush1.msra.mxu0 0.0
        %539 = vmatprep.subr.mxu0 0.0
        %540 = vmatpush1.msra.mxu0 0.0
        %541 = vmatprep.subr.mxu0 0.0
        %542 = vmatpush1.msra.mxu0 0.0
        %543 = vmatprep.subr.mxu0 0.0
        %544 = vmatpush1.msra.mxu0 0.0
        %545 = vmatprep.subr.mxu0 0.0
        %546 = vmatpush1.msra.mxu0 0.0
        %547 = vmatprep.subr.mxu0 0.0
        %548 = vmatpush1.msra.mxu0 0.0
        %549 = vmatprep.subr.mxu0 0.0
        %550 = vmatpush1.msra.mxu0 0.0
        %551 = vmatprep.subr.mxu0 0.0
        %552 = vmatpush1.msra.mxu0 0.0
        %553 = vmatprep.subr.mxu0 0.0
        %554 = vmatpush1.msra.mxu0 0.0
        %555 = vmatprep.subr.mxu0 0.0
        %556 = vmatpush1.msra.mxu0 0.0
        %557 = vmatprep.subr.mxu0 0.0
        %558 = vmatpush1.msra.mxu0 0.0
        %559 = vmatprep.subr.mxu0 0.0
        %560 = vmatpush1.msra.mxu0 0.0
        %561 = vmatprep.subr.mxu0 0.0
        %562 = vmatpush1.msra.mxu0 0.0
        %563 = vmatprep.subr.mxu0 0.0
        %564 = vmatpush1.msra.mxu0 0.0
        %565 = vmatprep.subr.mxu0 0.0
        %566 = vmatpush1.msra.mxu0 0.0
        %567 = vmatprep.subr.mxu0 0.0
        %568 = vmatpush1.msra.mxu0 0.0
        %569 = vmatprep.subr.mxu0 0.0
        %570 = vmatpush1.msra.mxu0 0.0
        %571 = vmatprep.mubr.f32.mxu0 0.0
        %572 = vmatmul.mubr.f32.gmra.mrb[0].mxu0 %v505
        %v573 = vpop.f32.mrb[0].mxu0
        %v574 = vadd.f32 0.0, %v573
        %v575 = vpop.f32.mrb[0].mxu0
        %576 = vdwg.mxu0
        %v577 = vadd.f32 %v498, %v574
        %v578 = vld [vmem:[%s3] sm:$0x1]
        %v580 = vlaneseq
        %v581 = vshrl.u32 %v580, 7
        %v582 = vsub.s32 0, %v581
        %v583 = vrot.slane %v578, %v582
        %v585 = vadd.f32 %v577, %v583
        %vm586 = vcmp.ge.f32.partialorder %v585, 0.0
        %v587 = vmul.f32 %v585, 0.2
        %v588 = vsel %vm586, %v585, %v587
        %589 = vst [vmem:[%s244] sm:$0xff] %v588
        %s590 = sand.u32 %s140, 1
        %s591 = scalar_lea.sflag [#allocation3], %s590
        %s592 = sand.u32 %s140, 1
        %s593 = smul.addr %s592, 8
        %s594 = scalar_lea.vmem [#allocation2], %s593
        // Predicated region
        $region37: #{tpu_custom_call.1} parent=35 // pred_check
          %p595 = pneg %p150
        $region38: #{tpu_custom_call.1} parent=35 // pred_check_branch
          %597 = sbr.rel (%p595) target = $region40
        $region39: #{tpu_custom_call.1} parent=35 // pred_region
          %s599 = ssub.s32 128, 128
          %600 = vsyncadd %s591, %s599
          %s601 = smul.addr %s22, 8
          %s602 = sadd.s32 %s23, %s601
          %s603 = smul.addr %s602, 128
          %s604 = scalar_lea.hbm %s4, %s603
          %s606 = sshll.u32 %s594, 4
          %s607 = int_to_ptr.vmem [resolvable:$true] %s606
          %609 = dma.vmem_to_hbm [thread:$0]  %s607, 128, %s604, %s591
        $region40: #{tpu_custom_call.1} parent=35 // pred_fallthru
          _
      $region36: #{tpu_custom_call.1} parent=5 // pred_fallthru
        _
      %p610 = scmp.le.s32.totalorder 2, %s13
      // Predicated region
      $region41: #{tpu_custom_call.1} parent=5 // pred_check
        %p611 = pneg %p610
      $region42: #{tpu_custom_call.1} parent=5 // pred_check_branch
        %613 = sbr.rel (%p611) target = $region44
      $region43: #{tpu_custom_call.1} parent=5 // pred_region
        %s614 = ssub.s32 %s13, 2
        // Predicated region
        $region45: #{tpu_custom_call.1} parent=43 // pred_check
          %p615 = pneg %p156
        $region46: #{tpu_custom_call.1} parent=43 // pred_check_branch
          %617 = sbr.rel (%p615) target = $region48
        $region47: #{tpu_custom_call.1} parent=43 // pred_region
          %s618 = sand.u32 %s141, 1
          %s619 = scalar_lea.sflag [#allocation3], %s618
          %s620 = sand.u32 %s141, 1
          %s621 = smul.addr %s620, 8
          %s622 = scalar_lea.vmem [#allocation2], %s621
          %623 = dma.done %s619, 128
        $region48: #{tpu_custom_call.1} parent=43 // pred_fallthru
          _
      $region44: #{tpu_custom_call.1} parent=5 // pred_fallthru
        _
    $region6: #{tpu_custom_call.1} parent=1 // loop_footer
      %s17 = sadd.s32 1, %s13
    $region7: #{tpu_custom_call.1} parent=1 // loop_footer_branch
      %12 = sbr.rel target = $region3
    $region8: #{tpu_custom_call.1} parent=1 // loop_exit
      _
    %624 = vsyncpa [#allocation3], 1
    %s625 = scalar_lea.sflag [#allocation3], 1
    %626 = vsyncpa %s625, 1

</llo_original>
